<compile_context>
chip_gen: v7x
topology: tpu7x:2x2x1
jax: 0.10.0
libtpu: 0.0.40
codegen_flags: <defaults>
</compile_context>

<pallas_src>
import functools

import jax
import jax.numpy as jnp
from jax import lax
from jax.experimental import pallas as pl
from jax.experimental.pallas import tpu as pltpu

_LANES = 128


def _safe_ce_kernel(logits_ref, tgt_ref, sum_ref, cnt_ref, *, ignore_index, n_rows):
    tile_n, c = logits_ref.shape
    logits = logits_ref[...].astype(jnp.float32)                 # (TN, C)
    tgt = tgt_ref[...]                                            # (TN, 1) int32

    # Rows past the true N (last tile may be partial) hold garbage; zero them
    # BEFORE exp so inf/NaN garbage can never poison the reduction.
    row_ids = pl.program_id(0) * tile_n + lax.broadcasted_iota(
        jnp.int32, (tile_n, 1), 0)                                # (TN, 1)
    in_bounds = row_ids < n_rows                                  # (TN, 1) bool
    logits = jnp.where(in_bounds, logits, 0.0)                    # (TN, C)

    # Numerically stable log-sum-exp per row.
    m = jnp.max(logits, axis=-1, keepdims=True)                   # (TN, 1)
    lse = m + jnp.log(jnp.sum(jnp.exp(logits - m), axis=-1, keepdims=True))

    # Target logit via a masked select (no one-hot materialization + extra mul).
    col_ids = lax.broadcasted_iota(jnp.int32, (tile_n, c), 1)
    tgt_logit = jnp.sum(jnp.where(col_ids == tgt, logits, 0.0),
                        axis=-1, keepdims=True)                   # (TN, 1)

    valid = jnp.logical_and(in_bounds, tgt != ignore_index)       # (TN, 1)
    validf = valid.astype(jnp.float32)
    loss = (lse - tgt_logit) * validf                             # (TN, 1)

    # Per-tile partials, broadcast across 128 lanes so the store is lane-dense.
    sum_ref[...] = jnp.broadcast_to(jnp.sum(loss, keepdims=True), sum_ref.shape)
    cnt_ref[...] = jnp.broadcast_to(jnp.sum(validf, keepdims=True), cnt_ref.shape)


def _vmem_capacity_bytes():
    try:
        cap = getattr(pltpu.get_tpu_info(), "vmem_capacity_bytes", None)
        if cap:
            return int(cap)
    except Exception:
        pass
    return 64 * 1024 * 1024  # conservative fallback: v7x per-TensorCore VMEM


def _pick_tile_n(n, c, itemsize):
    """Largest row tile whose double-buffered logits blocks fit ~1/4 of VMEM."""
    budget = _vmem_capacity_bytes() // 4          # rest left for f32 temps / pipeline
    rows = budget // max(1, 2 * c * itemsize)     # 2x: input double-buffering
    sub = 16 if itemsize == 2 else (32 if itemsize == 1 else 8)   # sublane packing
    rows = (rows // sub) * sub
    rows = max(sub, min(512, rows))
    n_ceil = -(-n // sub) * sub                   # no point tiling past (padded) n
    return min(rows, n_ceil)


def safe_cross_entropy_loss(logits, targets, ignore_index=-100, tile_n=None):
    """SafeCrossEntropyLoss.forward for logits (N, C), targets (N,)."""
    n, c = logits.shape
    itemsize = jnp.dtype(logits.dtype).itemsize
    if tile_n is None:
        tile_n = _pick_tile_n(n, c, itemsize)
    num_tiles = pl.cdiv(n, tile_n)

    tgt2d = targets.astype(jnp.int32).reshape(n, 1)

    # Scoped-VMEM budget: double-buffered native-dtype logits blocks plus generous
    # room for the f32 upcast / logsumexp temporaries, capped below physical VMEM.
    vmem_limit = int(2 * tile_n * c * itemsize + 6 * tile_n * c * 4 + (2 << 20))
    vmem_limit = max(min(vmem_limit, _vmem_capacity_bytes() * 3 // 4), 1 << 24)

    kernel = functools.partial(_safe_ce_kernel, ignore_index=ignore_index, n_rows=n)
    sum_tiles, cnt_tiles = pl.pallas_call(
        kernel,
        out_shape=(
            jax.ShapeDtypeStruct((num_tiles, _LANES), jnp.float32),
            jax.ShapeDtypeStruct((num_tiles, _LANES), jnp.float32),
        ),
        grid=(num_tiles,),
        in_specs=[
            pl.BlockSpec((tile_n, c), lambda i: (i, 0)),
            pl.BlockSpec((tile_n, 1), lambda i: (i, 0)),
        ],
        out_specs=(
            pl.BlockSpec((1, _LANES), lambda i: (i, 0)),
            pl.BlockSpec((1, _LANES), lambda i: (i, 0)),
        ),
        compiler_params=pltpu.CompilerParams(
            dimension_semantics=("parallel",),
            vmem_limit_bytes=vmem_limit,
        ),
    )(logits, tgt2d)

    total_sum = jnp.sum(sum_tiles[:, 0])
    total_cnt = jnp.sum(cnt_tiles[:, 0])
    # If no valid targets, return 0.0 (PyTorch returns a zero tensor).
    return jnp.where(total_cnt > 0,
                     total_sum / jnp.maximum(total_cnt, 1.0),
                     jnp.float32(0.0))


def _reference(logits, targets, ignore_index=-100):
    logits = logits.astype(jnp.float32)
    lse = jax.scipy.special.logsumexp(logits, axis=-1)
    safe_tgt = jnp.where(targets == ignore_index, 0, targets)
    tgt_logit = jnp.take_along_axis(logits, safe_tgt[:, None], axis=-1)[:, 0]
    loss = lse - tgt_logit
    valid = (targets != ignore_index).astype(jnp.float32)
    num_valid = jnp.sum(valid)
    return jnp.where(num_valid > 0, jnp.sum(loss * valid) / num_valid, 0.0)


if __name__ == "__main__":
    # SafeCrossEntropyLoss has no learnable parameters; only inputs are needed.
    key = jax.random.PRNGKey(0)
    k_logits, k_tgt, k_logits2, k_tgt2 = jax.random.split(key, 4)
    IGNORE = -100

    # Test 1: small f32 case.
    N, C = 16, 32
    logits = jax.random.normal(k_logits, (N, C), dtype=jnp.float32)
    targets = jax.random.randint(k_tgt, (N,), 0, C, dtype=jnp.int32)
    targets = targets.at[jnp.array([1, 5, 10])].set(IGNORE)

    out = jax.block_until_ready(safe_cross_entropy_loss(logits, targets, ignore_index=IGNORE))
    ref = _reference(logits, targets, ignore_index=IGNORE)
    assert jnp.allclose(out, ref, atol=1e-5, rtol=1e-5), (out, ref)

    # Test 2: "no valid targets" path (should return 0.0).
    all_ignored = jnp.full((N,), IGNORE, dtype=jnp.int32)
    out0 = jax.block_until_ready(
        safe_cross_entropy_loss(logits, all_ignored, ignore_index=IGNORE))
    assert out0 == 0.0

    # Test 3: ragged N (partial last tile, masked in-kernel) with bf16 logits.
    N2, C2 = 37, 48
    logits2 = jax.random.normal(k_logits2, (N2, C2), dtype=jnp.float32).astype(jnp.bfloat16)
    targets2 = jax.random.randint(k_tgt2, (N2,), 0, C2, dtype=jnp.int32)
    targets2 = targets2.at[jnp.array([0, 7, 20, 36])].set(IGNORE)
    out2 = jax.block_until_ready(
        safe_cross_entropy_loss(logits2, targets2, ignore_index=IGNORE, tile_n=16))
    ref2 = _reference(logits2.astype(jnp.float32), targets2, ignore_index=IGNORE)
    assert jnp.allclose(out2, ref2, atol=1e-4, rtol=1e-4), (out2, ref2)

    print("KERNEL_OK")
</pallas_src>

<mosaic_0001>
module attributes {stable_mosaic.version = 11 : i64} {
  func.func @_safe_ce_kernel(%arg0: i32, %arg1: memref<16x32xf32, #tpu.memory_space<vmem>>, %arg2: memref<16x1xi32, #tpu.memory_space<vmem>>, %arg3: memref<1x128xf32, #tpu.memory_space<vmem>>, %arg4: memref<1x128xf32, #tpu.memory_space<vmem>>) attributes {dimension_semantics = [#tpu.dimension_semantics<parallel>], iteration_bounds = array<i64: 1>, scalar_prefetch = 0 : i64, scratch_operands = 0 : i64, tpu.core_type = #tpu.core_type<tc>, window_params = [{transform_indices = @transform_0, window_bounds = array<i64: 16, 32>}, {transform_indices = @transform_1, window_bounds = array<i64: 16, 1>}, {transform_indices = @transform_2, window_bounds = array<i64: 1, 128>}, {transform_indices = @transform_3, window_bounds = array<i64: 1, 128>}]} {
    %c0 = arith.constant 0 : index
    %c0_0 = arith.constant 0 : index
    %0 = vector.load %arg1[%c0, %c0_0] : memref<16x32xf32, #tpu.memory_space<vmem>>, vector<16x32xf32>
    %c0_1 = arith.constant 0 : index
    %c0_2 = arith.constant 0 : index
    %1 = vector.load %arg2[%c0_1, %c0_2] : memref<16x1xi32, #tpu.memory_space<vmem>>, vector<16x1xi32>
    %c16_i32 = arith.constant 16 : i32
    %2 = arith.muli %arg0, %c16_i32 : i32
    %3 = tpu.iota {dimensions = array<i32: 0>} : vector<16x1xi32>
    %4 = vector.broadcast %2 : i32 to vector<16x1xi32>
    %5 = arith.addi %4, %3 : vector<16x1xi32>
    %c16_i32_3 = arith.constant 16 : i32
    %6 = vector.broadcast %c16_i32_3 : i32 to vector<16x1xi32>
    %7 = arith.cmpi slt, %5, %6 : vector<16x1xi32>
    %cst = arith.constant 0.000000e+00 : f32
    %8 = vector.shape_cast %7 : vector<16x1xi1> to vector<16x1xi1>
    %9 = vector.broadcast %8 : vector<16x1xi1> to vector<16x32xi1>
    %10 = vector.broadcast %cst : f32 to vector<16x32xf32>
    %11 = arith.select %9, %0, %10 : vector<16x32xi1>, vector<16x32xf32>
    %cst_4 = arith.constant dense<0xFF800000> : vector<16xf32>
    %12 = vector.multi_reduction <maximumf>, %11, %cst_4 [1] : vector<16x32xf32> to vector<16xf32>
    %13 = vector.shape_cast %12 : vector<16xf32> to vector<16x1xf32>
    %14 = vector.broadcast %13 : vector<16x1xf32> to vector<16x32xf32>
    %15 = arith.subf %11, %14 : vector<16x32xf32>
    %16 = math.exp %15 : vector<16x32xf32>
    %cst_5 = arith.constant dense<0.000000e+00> : vector<16xf32>
    %17 = vector.multi_reduction <add>, %16, %cst_5 [1] : vector<16x32xf32> to vector<16xf32>
    %18 = vector.shape_cast %17 : vector<16xf32> to vector<16x1xf32>
    %19 = math.log %18 : vector<16x1xf32>
    %20 = arith.addf %13, %19 : vector<16x1xf32>
    %21 = tpu.iota {dimensions = array<i32: 1>} : vector<16x32xi32>
    %22 = vector.broadcast %1 : vector<16x1xi32> to vector<16x32xi32>
    %23 = arith.cmpi eq, %21, %22 : vector<16x32xi32>
    %cst_6 = arith.constant 0.000000e+00 : f32
    %24 = vector.broadcast %cst_6 : f32 to vector<16x32xf32>
    %25 = arith.select %23, %11, %24 : vector<16x32xi1>, vector<16x32xf32>
    %cst_7 = arith.constant dense<0.000000e+00> : vector<16xf32>
    %26 = vector.multi_reduction <add>, %25, %cst_7 [1] : vector<16x32xf32> to vector<16xf32>
    %27 = vector.shape_cast %26 : vector<16xf32> to vector<16x1xf32>
    %c-100_i32 = arith.constant -100 : i32
    %28 = vector.broadcast %c-100_i32 : i32 to vector<16x1xi32>
    %29 = arith.cmpi ne, %1, %28 : vector<16x1xi32>
    %30 = arith.andi %7, %29 : vector<16x1xi1>
    %31 = arith.extui %30 : vector<16x1xi1> to vector<16x1xi32>
    %32 = arith.sitofp %31 : vector<16x1xi32> to vector<16x1xf32>
    %33 = arith.subf %20, %27 : vector<16x1xf32>
    %34 = arith.mulf %33, %32 : vector<16x1xf32>
    %35 = vector.shape_cast %34 : vector<16x1xf32> to vector<1x16x1xf32>
    %cst_8 = arith.constant dense<0.000000e+00> : vector<1xf32>
    %36 = vector.multi_reduction <add>, %35, %cst_8 [1, 2] : vector<1x16x1xf32> to vector<1xf32>
    %37 = vector.shape_cast %36 : vector<1xf32> to vector<1x1x1xf32>
    %38 = vector.extract %37[0, 0, 0] : f32 from vector<1x1x1xf32>
    %39 = vector.broadcast %38 : f32 to vector<1x1xf32>
    %40 = vector.shape_cast %39 : vector<1x1xf32> to vector<1x1xf32>
    %41 = vector.broadcast %40 : vector<1x1xf32> to vector<1x128xf32>
    %c0_9 = arith.constant 0 : index
    %c0_10 = arith.constant 0 : index
    %42 = vector.load %arg3[%c0_9, %c0_10] : memref<1x128xf32, #tpu.memory_space<vmem>>, vector<1x128xf32>
    tpu.vector_store %arg3[%c0_9, %c0_10], %41 {strides = array<i32>} : memref<1x128xf32, #tpu.memory_space<vmem>>, vector<1x128xf32>,
    %43 = vector.shape_cast %32 : vector<16x1xf32> to vector<1x16x1xf32>
    %cst_11 = arith.constant dense<0.000000e+00> : vector<1xf32>
    %44 = vector.multi_reduction <add>, %43, %cst_11 [1, 2] : vector<1x16x1xf32> to vector<1xf32>
    %45 = vector.shape_cast %44 : vector<1xf32> to vector<1x1x1xf32>
    %46 = vector.extract %45[0, 0, 0] : f32 from vector<1x1x1xf32>
    %47 = vector.broadcast %46 : f32 to vector<1x1xf32>
    %48 = vector.shape_cast %47 : vector<1x1xf32> to vector<1x1xf32>
    %49 = vector.broadcast %48 : vector<1x1xf32> to vector<1x128xf32>
    %c0_12 = arith.constant 0 : index
    %c0_13 = arith.constant 0 : index
    %50 = vector.load %arg4[%c0_12, %c0_13] : memref<1x128xf32, #tpu.memory_space<vmem>>, vector<1x128xf32>
    tpu.vector_store %arg4[%c0_12, %c0_13], %49 {strides = array<i32>} : memref<1x128xf32, #tpu.memory_space<vmem>>, vector<1x128xf32>,
    return
  }
  func.func @transform_0(%arg0: i32) -> (i32, i32) {
    %c0_i32 = arith.constant 0 : i32
    %c0_i32_0 = arith.constant 0 : i32
    return %arg0, %c0_i32 : i32, i32
  }
  func.func @transform_1(%arg0: i32) -> (i32, i32) {
    %c0_i32 = arith.constant 0 : i32
    %c0_i32_0 = arith.constant 0 : i32
    return %arg0, %c0_i32 : i32, i32
  }
  func.func @transform_2(%arg0: i32) -> (i32, i32) {
    %c0_i32 = arith.constant 0 : i32
    %c0_i32_0 = arith.constant 0 : i32
    return %arg0, %c0_i32 : i32, i32
  }
  func.func @transform_3(%arg0: i32) -> (i32, i32) {
    %c0_i32 = arith.constant 0 : i32
    %c0_i32_0 = arith.constant 0 : i32
    return %arg0, %c0_i32 : i32, i32
  }
}

</mosaic_0001>

<llo_original>
// kernel: tpu_custom_call.1
$region0: #{tpu_custom_call.1}
  #allocation0 [shape = 'u32[]', space=smem, size = 0x4, offset = 0x4, fixed_abs, tag = 'smem constant byte address 0x4 - core index']
  #allocation1 [shape = 'u32[144,128]{1,0:T(1,128)}', space=vmem, size = 0x12000, scoped, tag = 'internal scratch']
  %s0 = inlined_call_operand.vmem [shape: f32[16,32], index: 0, kind: input, shape index: {}]
  %s1 = inlined_call_operand.vmem [shape: s32[16,1], index: 1, kind: input, shape index: {}]
  %s2 = inlined_call_operand.hbm [shape: f32[1,128], index: 2, kind: output, shape index: {0}]
  %s3 = inlined_call_operand.hbm [shape: f32[1,128], index: 3, kind: output, shape index: {1}]
  %4 = xla_tuple %s2, %s3
  %s5 = sld [smem:[#allocation0]]
  $region26: #{tpu_custom_call.1} parent=0
    _
  %s7 = ssub.s32 1, %s5
  %s8 = scalar_select 0, %s7, %s5
  $region1: #{tpu_custom_call.1} parent=0
    #allocation2 [shape = 'u8[512]{0}', space=vmem, size = 0x400, scoped, tag = 'output window, operand 0, single buffered']
    #allocation3 [shape = 's32[1]{0}', space=sflag, size = 0x4, scoped, tag = 'scoped memory for tpu_custom_call.1']
    #allocation4 [shape = 'u8[512]{0}', space=vmem, size = 0x400, scoped, tag = 'output window, operand 1, single buffered']
    #allocation5 [shape = 's32[1]{0}', space=sflag, size = 0x4, scoped, tag = 'scoped memory for tpu_custom_call.1']
    %9 = vsyncpa [#allocation3], 0
    %10 = vsyncpa [#allocation5], 0
    // Predicated region
    $region2: #{tpu_custom_call.1} parent=1 // pred_check
      _
    $region3: #{tpu_custom_call.1} parent=1 // pred_check_branch
      %12 = sbr.rel (0) target = $region5
    $region4: #{tpu_custom_call.1} parent=1 // pred_region
      _
    $region5: #{tpu_custom_call.1} parent=1 // pred_fallthru
      _
    // Predicated region
    $region6: #{tpu_custom_call.1} parent=1 // pred_check
      _
    $region7: #{tpu_custom_call.1} parent=1 // pred_check_branch
      %14 = sbr.rel (0) target = $region9
    $region8: #{tpu_custom_call.1} parent=1 // pred_region
      _
    $region9: #{tpu_custom_call.1} parent=1 // pred_fallthru
      _
    %v15 = vld [vmem:[%s0] sm:$0xff]
    %v16 = vld [vmem:[%s0 + $0x8] sm:$0xff]
    %v17 = vld [vmem:[%s1] sm:$0xff]
    %v18 = vld [vmem:[%s1 + $0x8] sm:$0xff]
    %s19 = smul.u32 0, 16
    %v20 = vlaneseq
    %v21 = vshrl.u32 %v20, 7
    %v22 = vadd.s32 %v21, 8
    %v23 = vstv %s19
    %v24 = vadd.s32 %v23, %v21
    %v25 = vadd.s32 %v23, %v22
    %vm26 = vcmp.lt.s32.totalorder %v24, 16
    %vm27 = vcmp.lt.s32.totalorder %v25, 16
    %v28 = vsel %vm26, 1, 0
    %v29 = vsel %vm27, 1, 0
    %vm30 = vcmp.eq.s32.totalorder %v28, 1
    %vm31 = vcmp.eq.s32.totalorder %v29, 1
    %v32 = vsel %vm30, %v15, 0.0
    %v33 = vsel %vm31, %v16, 0.0
    %vm34 = vcmask 261120
    %v35 = vsel %vm34, %v32, -inf
    %36 = vmax.xlane.f32.xlu0 %v35
    %v37 = vpop.xlane.xlu0 %36
    %v38 = vsel %vm34, %v33, -inf
    %39 = vmax.xlane.f32.xlu0 %v38
    %v40 = vpop.xlane.xlu0 %39
    %v41 = vsub.f32 %v32, %v37
    %v42 = vsub.f32 %v33, %v40
    %v43 = vmul.f32 %v41, 1.442695
    %v44 = vpow.pop %v43
    %v45 = vmul.f32 %v42, 1.442695
    %v46 = vpow.pop %v45
    %v47 = vsel %vm34, %v44, 0.0
    %48 = vadd.xlane.f32.xlu0 %v47
    %v49 = vpop.xlane.xlu0 %48
    %v50 = vsel %vm34, %v46, 0.0
    %51 = vadd.xlane.f32.xlu0 %v50
    %v52 = vpop.xlane.xlu0 %51
    %v53 = vlog2.pop %v49
    %v54 = vmul.f32 %v53, 0.6931472
    %v55 = vlog2.pop %v52
    %v56 = vmul.f32 %v55, 0.6931472
    %v57 = vadd.f32 %v37, %v54
    %v58 = vadd.f32 %v40, %v56
    %v59 = vlaneseq
    %v60 = vand.u32 %v59, 127
    %61 = vset.pattern.permute.xlu0 0
    %62 = vperm.xlu0 %61, %v17
    %v63 = vpop.permute.xlu0 %62
    %64 = vset.pattern.permute.xlu0 0
    %65 = vperm.xlu0 %64, %v18
    %v66 = vpop.permute.xlu0 %65
    %vm67 = vcmp.eq.s32.totalorder %v60, %v63
    %vm68 = vcmp.eq.s32.totalorder %v60, %v66
    %v69 = vsel %vm67, %v32, 0.0
    %v70 = vsel %vm68, %v33, 0.0
    %v71 = vsel %vm34, %v69, 0.0
    %72 = vadd.xlane.f32.xlu0 %v71
    %v73 = vpop.xlane.xlu0 %72
    %v74 = vsel %vm34, %v70, 0.0
    %75 = vadd.xlane.f32.xlu0 %v74
    %v76 = vpop.xlane.xlu0 %75
    %vm77 = vcmp.ne.s32.totalorder %v17, 4294967196
    %vm78 = vcmp.ne.s32.totalorder %v18, 4294967196
    %vm79 = vmand %vm26, %vm77
    %vm80 = vmand %vm27, %vm78
    %v81 = vsel %vm79, 1, 0
    %v82 = vsel %vm80, 1, 0
    %v83 = vcvt.s32.f32 %v81
    %v84 = vcvt.s32.f32 %v82
    %v85 = vsub.f32 %v57, %v73
    %v86 = vsub.f32 %v58, %v76
    %v87 = vmul.f32 %v85, %v83
    %v88 = vmul.f32 %v86, %v84
    %vm89 = vcmask 7168
    %v90 = vsel %vm89, %v87, 0.0
    %v91 = vsel %vm89, %v88, 0.0
    %v92 = vadd.f32 %v90, %v91
    %93 = vadd.xlane.f32.xlu0 %v92
    %v94 = vpop.xlane.xlu0 %93
    %v95 = vrot.slane %v94, 4
    %v96 = vadd.f32 %v94, %v95
    %v97 = vrot.slane %v96, 2
    %v98 = vadd.f32 %v96, %v97
    %v99 = vrot.slane %v98, 1
    %v100 = vadd.f32 %v98, %v99
    %s101 = vtos %v100
    %v102 = vstv %s101
    %103 = vst [vmem:[#allocation2] sm:$0x1] %v102
    %v104 = vsel %vm89, %v83, 0.0
    %v105 = vsel %vm89, %v84, 0.0
    %v106 = vadd.f32 %v104, %v105
    %107 = vadd.xlane.f32.xlu0 %v106
    %v108 = vpop.xlane.xlu0 %107
    %v109 = vrot.slane %v108, 4
    %v110 = vadd.f32 %v108, %v109
    %v111 = vrot.slane %v110, 2
    %v112 = vadd.f32 %v110, %v111
    %v113 = vrot.slane %v112, 1
    %v114 = vadd.f32 %v112, %v113
    %s115 = vtos %v114
    %v116 = vstv %s115
    %117 = vst [vmem:[#allocation4] sm:$0x1] %v116
    // Predicated region
    $region10: #{tpu_custom_call.1} parent=1 // pred_check
      _
    $region11: #{tpu_custom_call.1} parent=1 // pred_check_branch
      %119 = sbr.rel (0) target = $region13
    $region12: #{tpu_custom_call.1} parent=1 // pred_region
      %s121 = ssub.s32 16, 16
      %122 = vsyncadd [#allocation3], %s121
      %s124 = sshll.u32 [#allocation2], 4
      %s125 = int_to_ptr.vmem [resolvable:$true] %s124
      %127 = dma.vmem_to_hbm [thread:$0]  %s125, 16, %s2, [#allocation3]
    $region13: #{tpu_custom_call.1} parent=1 // pred_fallthru
      _
    // Predicated region
    $region14: #{tpu_custom_call.1} parent=1 // pred_check
      _
    $region15: #{tpu_custom_call.1} parent=1 // pred_check_branch
      %129 = sbr.rel (0) target = $region17
    $region16: #{tpu_custom_call.1} parent=1 // pred_region
      %s131 = ssub.s32 16, 16
      %132 = vsyncadd [#allocation5], %s131
      %s134 = sshll.u32 [#allocation4], 4
      %s135 = int_to_ptr.vmem [resolvable:$true] %s134
      %137 = dma.vmem_to_hbm [thread:$0]  %s135, 16, %s3, [#allocation5]
    $region17: #{tpu_custom_call.1} parent=1 // pred_fallthru
      _
    // Predicated region
    $region18: #{tpu_custom_call.1} parent=1 // pred_check
      _
    $region19: #{tpu_custom_call.1} parent=1 // pred_check_branch
      %139 = sbr.rel (0) target = $region21
    $region20: #{tpu_custom_call.1} parent=1 // pred_region
      %140 = dma.done [#allocation3], 16
    $region21: #{tpu_custom_call.1} parent=1 // pred_fallthru
      _
    // Predicated region
    $region22: #{tpu_custom_call.1} parent=1 // pred_check
      _
    $region23: #{tpu_custom_call.1} parent=1 // pred_check_branch
      %142 = sbr.rel (0) target = $region25
    $region24: #{tpu_custom_call.1} parent=1 // pred_region
      %143 = dma.done [#allocation5], 16
    $region25: #{tpu_custom_call.1} parent=1 // pred_fallthru
      _
    %144 = vsyncpa [#allocation3], 1
    %145 = vsyncpa [#allocation5], 1

</llo_original>
